<compile_context>
chip_gen: v7x
topology: tpu7x:2x2x1
jax: 0.10.0
libtpu: 0.0.40
codegen_flags: <defaults>
</compile_context>

<pallas_src>
import functools

import jax
import jax.numpy as jnp
from jax.experimental import pallas as pl
from jax.experimental.pallas import tpu as pltpu


def _focal_ce_kernel(logits_ref, target_ref, sum_ref, cnt_ref, *, ignore_index):
    """One (image, pixel-tile) grid cell: CE partial sum + valid-pixel count."""
    tgt = target_ref[...]                                 # (1, T) int32
    valid = tgt != ignore_index                           # (1, T) bool

    logits = logits_ref[...].astype(jnp.float32)          # (C, T) single upcast

    # One-hot class selector via a sublane iota compare (reused below).
    # Note: if ignore_index < C this would pick a real class's logit for
    # ignored pixels, but those lanes are zeroed by the final `where` anyway.
    cls_ids = jax.lax.broadcasted_iota(jnp.int32, logits.shape, 0)
    is_tgt = cls_ids == tgt                                # (C, T) bool

    # Numerically-stable log-softmax CE over the channel (sublane) axis.
    # Both exp() and the picked-class logit reuse the same shifted array:
    #   ce = lse - picked = log(sum(exp(logits - m))) - (picked - m)
    m = jnp.max(logits, axis=0, keepdims=True)             # (1, T)
    shifted = logits - m                                    # (C, T)
    picked_shifted = jnp.sum(jnp.where(is_tgt, shifted, 0.0),
                             axis=0, keepdims=True)         # (1, T)
    sumexp = jnp.sum(jnp.exp(shifted), axis=0, keepdims=True)
    ce = jnp.log(sumexp) - picked_shifted                   # (1, T)

    # `where` (not multiply) so garbage logits in an out-of-bounds ragged tail
    # (NaN/Inf) cannot leak through ignored lanes.
    sum_ref[...] = jnp.sum(jnp.where(valid, ce, 0.0), keepdims=True)   # (1, 1)
    cnt_ref[...] = jnp.sum(valid.astype(jnp.float32), keepdims=True)   # (1, 1)


def focal_loss(logits_nchw, target_nhw, *, gamma=2.0, ignore_index=255,
               reduction="mean", target_block_bytes=2 * 1024 * 1024):
    """Focal loss matching the PyTorch module's forward semantics.

    TODO(synk): class weights (`alpha`) are None in the module defaults and are
    not plumbed through here.
    """
    N, C, H, W = logits_nchw.shape
    HW = H * W

    # NCHW -> (N, C, HW) is a free reshape (no HBM transpose): channels land on
    # sublanes, pixels on lanes inside the kernel.
    logits_ncp = logits_nchw.reshape(N, C, HW)
    target_np = target_nhw.reshape(N, 1, HW).astype(jnp.int32)
    # TODO(synk): for C<=255 the target could be carried as uint8 to shave the
    # remaining ~5-20% of HBM bytes at small class counts (lowering-risk vs win
    # judged not worth it here).

    # Tiny-spatial edge case: bring the pixel axis up to one 128-lane vreg.
    if HW < 128:
        logits_ncp = jnp.pad(logits_ncp, ((0, 0), (0, 0), (0, 128 - HW)))
        target_np = jnp.pad(target_np, ((0, 0), (0, 0), (0, 128 - HW)),
                            constant_values=ignore_index)
        HW = 128

    # Byte-targeted lane tile: ~target_block_bytes of logits per block (multiple
    # of 128 lanes), clamped to the (128-floored) pixel count so a block never
    # exceeds the array extent by more than the ragged tail of the last block.
    # That tail is read out-of-bounds (garbage) and masked via the
    # ignore_index-padded target -- the big logits tensor is never padded in HBM.
    bytes_per_px = C * logits_ncp.dtype.itemsize
    raw_tile = (target_block_bytes // bytes_per_px) // 128 * 128
    tile_eff = max(128, min(raw_tile, (HW // 128) * 128))

    n_tiles = (HW + tile_eff - 1) // tile_eff
    hw_padded = n_tiles * tile_eff
    if hw_padded != target_np.shape[-1]:
        # Only the tiny int32 target gets padded; pad value = ignore_index.
        target_np = jnp.pad(
            target_np,
            ((0, 0), (0, 0), (0, hw_padded - target_np.shape[-1])),
            constant_values=ignore_index)

    kern = functools.partial(_focal_ce_kernel, ignore_index=ignore_index)
    # Per-(image, tile) partials; no resident accumulator, so BOTH grid axes
    # are parallel (v7x megacore can split pixel tiles even at N=1).
    sum_part, cnt_part = pl.pallas_call(
        kern,
        out_shape=(jax.ShapeDtypeStruct((N, n_tiles, 1, 1), jnp.float32),
                   jax.ShapeDtypeStruct((N, n_tiles, 1, 1), jnp.float32)),
        grid_spec=pltpu.PrefetchScalarGridSpec(
            num_scalar_prefetch=0,
            grid=(N, n_tiles),
            in_specs=[
                # (C, tile) logits block; the N dim is squeezed out.
                # TODO(synk): sweep pipeline_mode=pl.Buffered(3) here once on
                # hardware (expected <=5%; VMEM headroom exists).
                pl.BlockSpec((None, C, tile_eff), lambda n, j: (n, 0, j)),
                # (1, tile) int32 targets.
                pl.BlockSpec((None, 1, tile_eff), lambda n, j: (n, 0, j)),
            ],
            out_specs=(
                pl.BlockSpec((None, None, 1, 1), lambda n, j: (n, j, 0, 0)),
                pl.BlockSpec((None, None, 1, 1), lambda n, j: (n, j, 0, 0)),
            )),
        compiler_params=pltpu.CompilerParams(
            dimension_semantics=("parallel", "parallel"),
            # Above v5e's 16 MiB scoped default, below v7x's 64 MiB physical;
            # ~2 MiB input blocks keep double-buffered logits + f32 compute
            # temporaries comfortably inside this budget on every generation.
            vmem_limit_bytes=40 * 1024 * 1024),
    )(logits_ncp, target_np)

    s = jnp.sum(sum_part)
    n_valid = jnp.sum(cnt_part)

    if reduction == "mean":
        # Note: with zero valid pixels this returns 0 (PyTorch would give NaN).
        logpt = s / jnp.maximum(n_valid, 1.0)   # CE mean over non-ignored pixels
    else:
        logpt = s                               # CE sum

    pt = jnp.exp(-logpt)
    loss = (1.0 - pt) ** gamma * logpt
    # The PyTorch module's trailing .mean()/.sum() on the scalar is a no-op.
    return loss


def _focal_loss_ref(logits_nchw, target_nhw, *, gamma=2.0, ignore_index=255):
    """Pure-JAX reference mirroring nn.CrossEntropyLoss(reduction='mean')."""
    N, C, H, W = logits_nchw.shape
    logits = jnp.transpose(logits_nchw, (0, 2, 3, 1)).reshape(-1, C)
    logits = logits.astype(jnp.float32)
    tgt = target_nhw.reshape(-1).astype(jnp.int32)
    valid = tgt != ignore_index
    lse = jax.scipy.special.logsumexp(logits, axis=-1)
    picked = jnp.take_along_axis(
        logits, jnp.where(valid, tgt, 0)[:, None], axis=-1)[:, 0]
    ce = jnp.where(valid, lse - picked, 0.0)
    logpt = jnp.sum(ce) / jnp.maximum(jnp.sum(valid.astype(jnp.float32)), 1.0)
    pt = jnp.exp(-logpt)
    return (1.0 - pt) ** gamma * logpt


if __name__ == "__main__":
    key = jax.random.PRNGKey(0)
    k1, k2 = jax.random.split(key, 2)

    def make_case(k, N, C, H, W):
        ka, kb, kc = jax.random.split(k, 3)
        logits = jax.random.normal(ka, (N, C, H, W), dtype=jnp.float32)
        target = jax.random.randint(kb, (N, H, W), 0, C, dtype=jnp.int32)
        ignore = jax.random.bernoulli(kc, 0.1, (N, H, W))
        return logits, jnp.where(ignore, 255, target)

    # Case 1: module-default small shape; one pixel tile per image.
    logits, target = make_case(k1, 2, 4, 16, 16)
    out = jax.block_until_ready(focal_loss(logits, target))
    ref = _focal_loss_ref(logits, target)
    assert jnp.allclose(out, ref, rtol=1e-5, atol=1e-5), (out, ref)

    # Case 2: tiny byte budget forces multiple pixel tiles per image
    # (exercises the per-tile-partials / both-axes-parallel path).
    out2 = jax.block_until_ready(focal_loss(logits, target, target_block_bytes=512))
    assert jnp.allclose(out2, ref, rtol=1e-5, atol=1e-5), (out2, ref)

    # Case 3: N=1, ragged pixel count (H*W not a multiple of the lane tile) and
    # a larger class count; exercises the masked out-of-bounds tail and the
    # pixel-axis parallelism at batch 1.
    logits3, target3 = make_case(k2, 1, 19, 20, 20)
    out3 = jax.block_until_ready(focal_loss(logits3, target3))
    ref3 = _focal_loss_ref(logits3, target3)
    assert jnp.allclose(out3, ref3, rtol=1e-5, atol=1e-5), (out3, ref3)

    # Case 4: bf16 logits in HBM (half the DMA bytes); kernel upcasts to f32.
    logits4 = logits.astype(jnp.bfloat16)
    out4 = jax.block_until_ready(focal_loss(logits4, target))
    ref4 = _focal_loss_ref(logits4.astype(jnp.float32), target)
    assert jnp.allclose(out4, ref4, rtol=1e-5, atol=1e-5), (out4, ref4)

    print("KERNEL_OK")
</pallas_src>

<mosaic_0001>
module attributes {stable_mosaic.version = 11 : i64} {
  func.func @_focal_ce_kernel(%arg0: i32, %arg1: i32, %arg2: memref<1x4x256xf32, #tpu.memory_space<vmem>>, %arg3: memref<1x1x256xi32, #tpu.memory_space<vmem>>, %arg4: memref<1x1x1x1xf32, #tpu.memory_space<vmem>>, %arg5: memref<1x1x1x1xf32, #tpu.memory_space<vmem>>) attributes {dimension_semantics = [#tpu.dimension_semantics<parallel>, #tpu.dimension_semantics<parallel>], iteration_bounds = array<i64: 2, 1>, scalar_prefetch = 0 : i64, scratch_operands = 0 : i64, tpu.core_type = #tpu.core_type<tc>, window_params = [{transform_indices = @transform_0, window_bounds = array<i64: 1, 4, 256>}, {transform_indices = @transform_1, window_bounds = array<i64: 1, 1, 256>}, {transform_indices = @transform_2, window_bounds = array<i64: 1, 1, 1, 1>}, {transform_indices = @transform_3, window_bounds = array<i64: 1, 1, 1, 1>}]} {
    %c0 = arith.constant 0 : index
    %c0_0 = arith.constant 0 : index
    %c0_1 = arith.constant 0 : index
    %0 = vector.load %arg3[%c0, %c0_0, %c0_1] : memref<1x1x256xi32, #tpu.memory_space<vmem>>, vector<1x1x256xi32>
    %1 = vector.shape_cast %0 : vector<1x1x256xi32> to vector<1x256xi32>
    %c255_i32 = arith.constant 255 : i32
    %2 = vector.broadcast %c255_i32 : i32 to vector<1x256xi32>
    %3 = arith.cmpi ne, %1, %2 : vector<1x256xi32>
    %c0_2 = arith.constant 0 : index
    %c0_3 = arith.constant 0 : index
    %c0_4 = arith.constant 0 : index
    %4 = vector.load %arg2[%c0_2, %c0_3, %c0_4] : memref<1x4x256xf32, #tpu.memory_space<vmem>>, vector<1x4x256xf32>
    %5 = vector.shape_cast %4 : vector<1x4x256xf32> to vector<4x256xf32>
    %6 = tpu.iota {dimensions = array<i32: 0>} : vector<4x256xi32>
    %7 = vector.broadcast %1 : vector<1x256xi32> to vector<4x256xi32>
    %8 = arith.cmpi eq, %6, %7 : vector<4x256xi32>
    %cst = arith.constant dense<0xFF800000> : vector<256xf32>
    %9 = vector.multi_reduction <maximumf>, %5, %cst [0] : vector<4x256xf32> to vector<256xf32>
    %10 = vector.shape_cast %9 : vector<256xf32> to vector<1x256xf32>
    %11 = vector.broadcast %10 : vector<1x256xf32> to vector<4x256xf32>
    %12 = arith.subf %5, %11 : vector<4x256xf32>
    %cst_5 = arith.constant 0.000000e+00 : f32
    %13 = vector.broadcast %cst_5 : f32 to vector<4x256xf32>
    %14 = arith.select %8, %12, %13 : vector<4x256xi1>, vector<4x256xf32>
    %cst_6 = arith.constant dense<0.000000e+00> : vector<256xf32>
    %15 = vector.multi_reduction <add>, %14, %cst_6 [0] : vector<4x256xf32> to vector<256xf32>
    %16 = vector.shape_cast %15 : vector<256xf32> to vector<1x256xf32>
    %17 = math.exp %12 : vector<4x256xf32>
    %cst_7 = arith.constant dense<0.000000e+00> : vector<256xf32>
    %18 = vector.multi_reduction <add>, %17, %cst_7 [0] : vector<4x256xf32> to vector<256xf32>
    %19 = vector.shape_cast %18 : vector<256xf32> to vector<1x256xf32>
    %20 = math.log %19 : vector<1x256xf32>
    %21 = arith.subf %20, %16 : vector<1x256xf32>
    %cst_8 = arith.constant 0.000000e+00 : f32
    %22 = vector.broadcast %cst_8 : f32 to vector<1x256xf32>
    %23 = arith.select %3, %21, %22 : vector<1x256xi1>, vector<1x256xf32>
    %24 = vector.shape_cast %23 : vector<1x256xf32> to vector<1x1x256xf32>
    %cst_9 = arith.constant dense<0.000000e+00> : vector<1xf32>
    %25 = vector.multi_reduction <add>, %24, %cst_9 [1, 2] : vector<1x1x256xf32> to vector<1xf32>
    %26 = vector.shape_cast %25 : vector<1xf32> to vector<1x1x1xf32>
    %27 = vector.extract %26[0, 0, 0] : f32 from vector<1x1x1xf32>
    %28 = vector.broadcast %27 : f32 to vector<1x1xf32>
    %c0_10 = arith.constant 0 : index
    %c0_11 = arith.constant 0 : index
    %c0_12 = arith.constant 0 : index
    %c0_13 = arith.constant 0 : index
    %29 = vector.load %arg4[%c0_10, %c0_11, %c0_12, %c0_13] : memref<1x1x1x1xf32, #tpu.memory_space<vmem>>, vector<1x1x1x1xf32>
    %30 = vector.shape_cast %29 : vector<1x1x1x1xf32> to vector<1x1xf32>
    %31 = vector.shape_cast %28 : vector<1x1xf32> to vector<1x1x1x1xf32>
    tpu.vector_store %arg4[%c0_10, %c0_11, %c0_12, %c0_13], %31 {strides = array<i32>} : memref<1x1x1x1xf32, #tpu.memory_space<vmem>>, vector<1x1x1x1xf32>,
    %32 = arith.extui %3 : vector<1x256xi1> to vector<1x256xi32>
    %33 = arith.sitofp %32 : vector<1x256xi32> to vector<1x256xf32>
    %34 = vector.shape_cast %33 : vector<1x256xf32> to vector<1x1x256xf32>
    %cst_14 = arith.constant dense<0.000000e+00> : vector<1xf32>
    %35 = vector.multi_reduction <add>, %34, %cst_14 [1, 2] : vector<1x1x256xf32> to vector<1xf32>
    %36 = vector.shape_cast %35 : vector<1xf32> to vector<1x1x1xf32>
    %37 = vector.extract %36[0, 0, 0] : f32 from vector<1x1x1xf32>
    %38 = vector.broadcast %37 : f32 to vector<1x1xf32>
    %c0_15 = arith.constant 0 : index
    %c0_16 = arith.constant 0 : index
    %c0_17 = arith.constant 0 : index
    %c0_18 = arith.constant 0 : index
    %39 = vector.load %arg5[%c0_15, %c0_16, %c0_17, %c0_18] : memref<1x1x1x1xf32, #tpu.memory_space<vmem>>, vector<1x1x1x1xf32>
    %40 = vector.shape_cast %39 : vector<1x1x1x1xf32> to vector<1x1xf32>
    %41 = vector.shape_cast %38 : vector<1x1xf32> to vector<1x1x1x1xf32>
    tpu.vector_store %arg5[%c0_15, %c0_16, %c0_17, %c0_18], %41 {strides = array<i32>} : memref<1x1x1x1xf32, #tpu.memory_space<vmem>>, vector<1x1x1x1xf32>,
    return
  }
  func.func @transform_0(%arg0: i32, %arg1: i32) -> (i32, i32, i32) {
    %c0_i32 = arith.constant 0 : i32
    %c0_i32_0 = arith.constant 0 : i32
    return %arg0, %c0_i32, %arg1 : i32, i32, i32
  }
  func.func @transform_1(%arg0: i32, %arg1: i32) -> (i32, i32, i32) {
    %c0_i32 = arith.constant 0 : i32
    %c0_i32_0 = arith.constant 0 : i32
    return %arg0, %c0_i32, %arg1 : i32, i32, i32
  }
  func.func @transform_2(%arg0: i32, %arg1: i32) -> (i32, i32, i32, i32) {
    %c0_i32 = arith.constant 0 : i32
    %c0_i32_0 = arith.constant 0 : i32
    %c0_i32_1 = arith.constant 0 : i32
    return %arg0, %arg1, %c0_i32, %c0_i32_0 : i32, i32, i32, i32
  }
  func.func @transform_3(%arg0: i32, %arg1: i32) -> (i32, i32, i32, i32) {
    %c0_i32 = arith.constant 0 : i32
    %c0_i32_0 = arith.constant 0 : i32
    %c0_i32_1 = arith.constant 0 : i32
    return %arg0, %arg1, %c0_i32, %c0_i32_0 : i32, i32, i32, i32
  }
}

</mosaic_0001>

<llo_original>
// kernel: tpu_custom_call.1
$region0: #{tpu_custom_call.1}
  #allocation0 [shape = 'u32[]', space=smem, size = 0x4, offset = 0x4, fixed_abs, tag = 'smem constant byte address 0x4 - core index']
  #allocation1 [shape = 'u32[144,128]{1,0:T(1,128)}', space=vmem, size = 0x12000, scoped, tag = 'internal scratch']
  %s0 = inlined_call_operand.hbm [shape: f32[2,4,256], index: 0, kind: input, shape index: {}]
  %s1 = inlined_call_operand.hbm [shape: s32[2,1,256], index: 1, kind: input, shape index: {}]
  %s2 = inlined_call_operand.vmem [shape: f32[2,1,1,1], index: 2, kind: output, shape index: {0}]
  %s3 = inlined_call_operand.vmem [shape: f32[2,1,1,1], index: 3, kind: output, shape index: {1}]
  %4 = xla_tuple %s2, %s3
  %s5 = sld [smem:[#allocation0]]
  $region57: #{tpu_custom_call.1} parent=0
    _
  %s7 = ssub.s32 1, %s5
  %s8 = scalar_select 0, %s7, %s5
  $region1: #{tpu_custom_call.1} parent=0
    #allocation2 [shape = 'u8[8192]{0}', space=vmem, size = 0x2000, scoped, tag = 'input window, operand 0']
    #allocation3 [shape = 's32[2]{0}', space=sflag, size = 0x8, scoped, tag = 'scoped memory for tpu_custom_call.1']
    #allocation4 [shape = 'u8[2048]{0}', space=vmem, size = 0x800, scoped, tag = 'input window, operand 1']
    #allocation5 [shape = 's32[2]{0}', space=sflag, size = 0x8, scoped, tag = 'scoped memory for tpu_custom_call.1']
    %9 = vsyncpa [#allocation3], 0
    %s10 = scalar_lea.sflag [#allocation3], 1
    %11 = vsyncpa %s10, 0
    %12 = vsyncpa [#allocation5], 0
    %s13 = scalar_lea.sflag [#allocation5], 1
    %14 = vsyncpa %s13, 0
    loop: start=0, step=1, limit=4
    $region2: #{tpu_custom_call.1} parent=1 // loop_pre_header
      _
    $region3: #{tpu_custom_call.1} parent=1 // loop_header
      %s16 = sphi 0, %s20
      %p17 = scmp.ge.s32.totalorder %s16, 4
      %s23 = sphi 0, %s35
      %s24 = sphi 0, %s31
      %s25 = sphi 0, %s23
      %s26 = sphi 0, %s24
      %s27 = sphi 0, %s25
      %s28 = sphi 0, %s26
      %s40 = sphi 0, %s42
      %s43 = sphi 0, %s40
      %s44 = sphi 0, %s43
      %s60 = sphi 0, %s44
      %s68 = sphi 0, %s70
      %s71 = sphi 0, %s68
      %s72 = sphi 0, %s71
      %s88 = sphi 0, %s72
      %s96 = sphi 0, %s98
      %s99 = sphi 0, %s96
      %s100 = sphi 0, %s99
      %s116 = sphi 0, %s100
      %s124 = sphi 0, %s126
      %s127 = sphi 0, %s124
      %s128 = sphi 0, %s127
      %s144 = sphi 0, %s128
    $region4: #{tpu_custom_call.1} parent=1 // loop_header_branch
      %19 = sbr.rel (%p17) target = $region8
    $region5: #{tpu_custom_call.1} parent=1 // loop_body
      %s21 = ssub.s32 %s16, 1
      %s22 = ssub.s32 %s16, 2
      %s29 = sadd.s32 1, %s24
      %p30 = scmp.ge.s32.totalorder %s29, 1
      %s31 = scalar_select %p30, 0, %s29
      %s32 = sadd.s32 1, %s23
      %s33 = scalar_select %p30, %s32, %s23
      %p34 = scmp.ge.s32.totalorder %s33, 2
      %s35 = scalar_select %p34, 0, %s33
      %s36 = ssub.s32 %s23, %s35
      %s37 = ssub.s32 %s24, %s31
      %s38 = sor.u32 %s36, %s37
      %p39 = scmp.eq.s32.totalorder %s38, 0
      %s41 = sadd.s32 %s40, 1
      %s42 = scalar_select %p39, %s40, %s41
      %p45 = pneg %p39
      %p46 = scmp.eq.s32.totalorder %s16, 1
      %p47 = por %p45, %p46
      %p48 = scmp.ne.s32.totalorder %s40, %s43
      %p49 = scmp.eq.s32.totalorder %s16, 0
      %p50 = por %p48, %p49
      %p51 = scmp.ne.s32.totalorder %s40, %s43
      %p52 = scmp.eq.s32.totalorder %s21, 1
      %p53 = por %p51, %p52
      %p54 = scmp.ne.s32.totalorder %s43, %s44
      %p55 = scmp.eq.s32.totalorder %s21, 0
      %p56 = por %p54, %p55
      %p57 = scmp.ne.s32.totalorder %s43, %s44
      %p58 = scmp.eq.s32.totalorder %s22, 1
      %p59 = por %p57, %p58
      %p61 = scmp.ne.s32.totalorder %s44, %s60
      %p62 = scmp.eq.s32.totalorder %s22, 0
      %p63 = por %p61, %p62
      %s64 = ssub.s32 %s23, %s35
      %s65 = ssub.s32 %s24, %s31
      %s66 = sor.u32 %s64, %s65
      %p67 = scmp.eq.s32.totalorder %s66, 0
      %s69 = sadd.s32 %s68, 1
      %s70 = scalar_select %p67, %s68, %s69
      %p73 = pneg %p67
      %p74 = scmp.eq.s32.totalorder %s16, 1
      %p75 = por %p73, %p74
      %p76 = scmp.ne.s32.totalorder %s68, %s71
      %p77 = scmp.eq.s32.totalorder %s16, 0
      %p78 = por %p76, %p77
      %p79 = scmp.ne.s32.totalorder %s68, %s71
      %p80 = scmp.eq.s32.totalorder %s21, 1
      %p81 = por %p79, %p80
      %p82 = scmp.ne.s32.totalorder %s71, %s72
      %p83 = scmp.eq.s32.totalorder %s21, 0
      %p84 = por %p82, %p83
      %p85 = scmp.ne.s32.totalorder %s71, %s72
      %p86 = scmp.eq.s32.totalorder %s22, 1
      %p87 = por %p85, %p86
      %p89 = scmp.ne.s32.totalorder %s72, %s88
      %p90 = scmp.eq.s32.totalorder %s22, 0
      %p91 = por %p89, %p90
      %s92 = ssub.s32 %s23, %s35
      %s93 = ssub.s32 %s24, %s31
      %s94 = sor.u32 %s92, %s93
      %p95 = scmp.eq.s32.totalorder %s94, 0
      %s97 = sadd.s32 %s96, 1
      %s98 = scalar_select %p95, %s96, %s97
      %p101 = pneg %p95
      %p102 = scmp.eq.s32.totalorder %s16, 1
      %p103 = por %p101, %p102
      %p104 = scmp.ne.s32.totalorder %s96, %s99
      %p105 = scmp.eq.s32.totalorder %s16, 0
      %p106 = por %p104, %p105
      %p107 = scmp.ne.s32.totalorder %s96, %s99
      %p108 = scmp.eq.s32.totalorder %s21, 1
      %p109 = por %p107, %p108
      %p110 = scmp.ne.s32.totalorder %s99, %s100
      %p111 = scmp.eq.s32.totalorder %s21, 0
      %p112 = por %p110, %p111
      %p113 = scmp.ne.s32.totalorder %s99, %s100
      %p114 = scmp.eq.s32.totalorder %s22, 1
      %p115 = por %p113, %p114
      %p117 = scmp.ne.s32.totalorder %s100, %s116
      %p118 = scmp.eq.s32.totalorder %s22, 0
      %p119 = por %p117, %p118
      %s120 = ssub.s32 %s23, %s35
      %s121 = ssub.s32 %s24, %s31
      %s122 = sor.u32 %s120, %s121
      %p123 = scmp.eq.s32.totalorder %s122, 0
      %s125 = sadd.s32 %s124, 1
      %s126 = scalar_select %p123, %s124, %s125
      %p129 = pneg %p123
      %p130 = scmp.eq.s32.totalorder %s16, 1
      %p131 = por %p129, %p130
      %p132 = scmp.ne.s32.totalorder %s124, %s127
      %p133 = scmp.eq.s32.totalorder %s16, 0
      %p134 = por %p132, %p133
      %p135 = scmp.ne.s32.totalorder %s124, %s127
      %p136 = scmp.eq.s32.totalorder %s21, 1
      %p137 = por %p135, %p136
      %p138 = scmp.ne.s32.totalorder %s127, %s128
      %p139 = scmp.eq.s32.totalorder %s21, 0
      %p140 = por %p138, %p139
      %p141 = scmp.ne.s32.totalorder %s127, %s128
      %p142 = scmp.eq.s32.totalorder %s22, 1
      %p143 = por %p141, %p142
      %p145 = scmp.ne.s32.totalorder %s128, %s144
      %p146 = scmp.eq.s32.totalorder %s22, 0
      %p147 = por %p145, %p146
      %p148 = scmp.le.s32.totalorder 1, %s16
      %p149 = scmp.lt.s32.totalorder %s16, 3
      %p150 = pnand %p148, %p149
      %p151 = pneg %p150
      // Predicated region
      $region9: #{tpu_custom_call.1} parent=5 // pred_check
        _
      $region10: #{tpu_custom_call.1} parent=5 // pred_check_branch
        %153 = sbr.rel (%p150) target = $region12
      $region11: #{tpu_custom_call.1} parent=5 // pred_region
        %s154 = ssub.s32 %s16, 1
      $region12: #{tpu_custom_call.1} parent=5 // pred_fallthru
        _
      %p155 = scmp.lt.s32.totalorder %s16, 2
      // Predicated region
      $region13: #{tpu_custom_call.1} parent=5 // pred_check
        %p156 = pneg %p155
      $region14: #{tpu_custom_call.1} parent=5 // pred_check_branch
        %158 = sbr.rel (%p156) target = $region16
      $region15: #{tpu_custom_call.1} parent=5 // pred_region
        // Predicated region
        $region17: #{tpu_custom_call.1} parent=15 // pred_check
          %p159 = pneg %p50
        $region18: #{tpu_custom_call.1} parent=15 // pred_check_branch
          %161 = sbr.rel (%p159) target = $region20
        $region19: #{tpu_custom_call.1} parent=15 // pred_region
          %s162 = sand.u32 %s40, 1
          %s163 = scalar_lea.sflag [#allocation3], %s162
          %s164 = sand.u32 %s40, 1
          %s165 = smul.addr %s164, 8
          %s166 = scalar_lea.vmem [#allocation2], %s165
          %s167 = smul.u32 2, %s24
          %s169 = ssub.s32 128, 128
          %170 = vsyncadd %s163, %s169
          %s171 = smul.addr %s23, 2
          %s172 = sadd.s32 %s167, %s171
          %s173 = smul.addr %s172, 64
          %s174 = scalar_lea.hbm %s0, %s173
          %s176 = sshll.u32 %s166, 4
          %s177 = int_to_ptr.vmem [resolvable:$true] %s176
          %179 = dma.hbm_to_vmem [thread:$0]  %s174, 128, %s177, %s163
        $region20: #{tpu_custom_call.1} parent=15 // pred_fallthru
          _
        // Predicated region
        $region21: #{tpu_custom_call.1} parent=15 // pred_check
          %p180 = pneg %p78
        $region22: #{tpu_custom_call.1} parent=15 // pred_check_branch
          %182 = sbr.rel (%p180) target = $region24
        $region23: #{tpu_custom_call.1} parent=15 // pred_region
          %s183 = sand.u32 %s68, 1
          %s184 = scalar_lea.sflag [#allocation5], %s183
          %s185 = sand.u32 %s68, 1
          %s186 = smul.addr %s185, 2
          %s187 = scalar_lea.vmem [#allocation4], %s186
          %s188 = smul.u32 2, %s24
          %s190 = ssub.s32 32, 32
          %191 = vsyncadd %s184, %s190
          %s192 = smul.addr %s23, 2
          %s193 = sadd.s32 %s188, %s192
          %s194 = smul.addr %s193, 16
          %s195 = scalar_lea.hbm %s1, %s194
          %s197 = sshll.u32 %s187, 4
          %s198 = int_to_ptr.vmem [resolvable:$true] %s197
          %200 = dma.hbm_to_vmem [thread:$0]  %s195, 32, %s198, %s184
        $region24: #{tpu_custom_call.1} parent=15 // pred_fallthru
          _
      $region16: #{tpu_custom_call.1} parent=5 // pred_fallthru
        _
      %p201 = scmp.le.s32.totalorder 1, %s16
      %p202 = scmp.lt.s32.totalorder %s16, 3
      %p203 = pnand %p201, %p202
      %p204 = pneg %p203
      // Predicated region
      $region25: #{tpu_custom_call.1} parent=5 // pred_check
        _
      $region26: #{tpu_custom_call.1} parent=5 // pred_check_branch
        %206 = sbr.rel (%p203) target = $region28
      $region27: #{tpu_custom_call.1} parent=5 // pred_region
        %s207 = ssub.s32 %s16, 1
        %s208 = sand.u32 %s43, 1
        %s209 = scalar_lea.sflag [#allocation3], %s208
        %s210 = sand.u32 %s43, 1
        %s211 = smul.addr %s210, 8
        %s212 = scalar_lea.vmem [#allocation2], %s211
        // Predicated region
        $region29: #{tpu_custom_call.1} parent=27 // pred_check
          %p213 = pneg %p56
        $region30: #{tpu_custom_call.1} parent=27 // pred_check_branch
          %215 = sbr.rel (%p213) target = $region32
        $region31: #{tpu_custom_call.1} parent=27 // pred_region
          %216 = dma.done %s209, 128
        $region32: #{tpu_custom_call.1} parent=27 // pred_fallthru
          _
        %s217 = sand.u32 %s71, 1
        %s218 = scalar_lea.sflag [#allocation5], %s217
        %s219 = sand.u32 %s71, 1
        %s220 = smul.addr %s219, 2
        %s221 = scalar_lea.vmem [#allocation4], %s220
        // Predicated region
        $region33: #{tpu_custom_call.1} parent=27 // pred_check
          %p222 = pneg %p84
        $region34: #{tpu_custom_call.1} parent=27 // pred_check_branch
          %224 = sbr.rel (%p222) target = $region36
        $region35: #{tpu_custom_call.1} parent=27 // pred_region
          %225 = dma.done %s218, 32
        $region36: #{tpu_custom_call.1} parent=27 // pred_fallthru
          _
        %s226 = sand.u32 %s43, 1
        %s227 = scalar_lea.sflag [#allocation3], %s226
        %s228 = sand.u32 %s43, 1
        %s229 = smul.addr %s228, 8
        %s230 = scalar_lea.vmem [#allocation2], %s229
        %p231 = pneg %p56
        %p232 = pneg %p53
        %s233 = sand.u32 %s71, 1
        %s234 = scalar_lea.sflag [#allocation5], %s233
        %s235 = sand.u32 %s71, 1
        %s236 = smul.addr %s235, 2
        %s237 = scalar_lea.vmem [#allocation4], %s236
        %p238 = pneg %p84
        %p239 = pneg %p81
        %p240 = pneg %p112
        %p241 = pneg %p109
        %p242 = scmp.lt.s32.totalorder %s25, 1
        %s243 = scalar_select %p242, %s25, 1
        %p244 = scmp.lt.s32.totalorder %s26, 0
        %s245 = scalar_select %p244, %s26, 0
        %s246 = sadd.s32 %s245, %s243
        %s247 = scalar_lea.vmem %s2, %s246
        %p248 = pneg %p140
        %p249 = pneg %p137
        %p250 = scmp.lt.s32.totalorder %s25, 1
        %s251 = scalar_select %p250, %s25, 1
        %p252 = scmp.lt.s32.totalorder %s26, 0
        %s253 = scalar_select %p252, %s26, 0
        %s254 = sadd.s32 %s253, %s251
        %s255 = scalar_lea.vmem %s3, %s254
        %s256 = smul.u32 2, %s26
        %s257 = smul.u32 2, %s26
        %p258 = scmp.lt.s32.totalorder %s25, 1
        %s259 = scalar_select %p258, %s25, 1
        %p260 = scmp.lt.s32.totalorder %s26, 0
        %s261 = scalar_select %p260, %s26, 0
        %s262 = sadd.s32 %s261, %s259
        %s263 = scalar_lea.vmem %s2, %s262
        %p264 = scmp.lt.s32.totalorder %s25, 1
        %s265 = scalar_select %p264, %s25, 1
        %p266 = scmp.lt.s32.totalorder %s26, 0
        %s267 = scalar_select %p266, %s26, 0
        %s268 = sadd.s32 %s267, %s265
        %s269 = scalar_lea.vmem %s3, %s268
        %v270 = vld [vmem:[%s221] sm:$0x3]
        %vm271 = vcmp.ne.s32.totalorder %v270, 255
        %v272 = vld [vmem:[%s212] sm:$0xff]
        %v273 = vlaneseq
        %v274 = vshrl.u32 %v273, 7
        %v275 = vlaneseq
        %v276 = vshrl.u32 %v275, 7
        %v277 = vsub.s32 0, %v276
        %v278 = vrot.slane %v270, %v277
        %v279 = vlaneseq
        %v280 = vshrl.u32 %v279, 7
        %v281 = vsub.s32 1, %v280
        %v282 = vrot.slane %v270, %v281
        %vm283 = vcmp.eq.s32.totalorder %v274, %v278
        %vm284 = vcmp.eq.s32.totalorder %v274, %v282
        %v286 = vcombine.high %v272, %v272
        %vm288 = vcmask 1043456
        %v289 = vsel %vm288, %v272, -inf
        %v290 = vrot.slane %v289, 4
        %v291 = vmax.f32 %v289, %v290
        %v292 = vrot.slane %v291, 2
        %v293 = vmax.f32 %v291, %v292
        %v294 = vrot.slane %v293, 1
        %v295 = vmax.f32 %v293, %v294
        %v296 = vsel %vm288, %v286, -inf
        %v297 = vrot.slane %v296, 4
        %v298 = vmax.f32 %v296, %v297
        %v299 = vrot.slane %v298, 2
        %v300 = vmax.f32 %v298, %v299
        %v301 = vrot.slane %v300, 1
        %v302 = vmax.f32 %v300, %v301
        %v305 = vcombine.low %v295, %v302
        %v307 = vsub.f32 %v272, %v305
        %v309 = vcombine.high %v307, %v307
        %v311 = vsel %vm283, %v307, 0.0
        %v312 = vsel %vm284, %v309, 0.0
        %v313 = vsel %vm288, %v311, 0.0
        %v314 = vrot.slane %v313, 4
        %v315 = vadd.f32 %v313, %v314
        %v316 = vrot.slane %v315, 2
        %v317 = vadd.f32 %v315, %v316
        %v318 = vrot.slane %v317, 1
        %v319 = vadd.f32 %v317, %v318
        %v320 = vsel %vm288, %v312, 0.0
        %v321 = vrot.slane %v320, 4
        %v322 = vadd.f32 %v320, %v321
        %v323 = vrot.slane %v322, 2
        %v324 = vadd.f32 %v322, %v323
        %v325 = vrot.slane %v324, 1
        %v326 = vadd.f32 %v324, %v325
        %v327 = vmul.f32 %v307, 1.442695
        %v328 = vpow.pop %v327
        %v330 = vcombine.high %v328, %v328
        %v332 = vsel %vm288, %v328, 0.0
        %v333 = vrot.slane %v332, 4
        %v334 = vadd.f32 %v332, %v333
        %v335 = vrot.slane %v334, 2
        %v336 = vadd.f32 %v334, %v335
        %v337 = vrot.slane %v336, 1
        %v338 = vadd.f32 %v336, %v337
        %v339 = vsel %vm288, %v330, 0.0
        %v340 = vrot.slane %v339, 4
        %v341 = vadd.f32 %v339, %v340
        %v342 = vrot.slane %v341, 2
        %v343 = vadd.f32 %v341, %v342
        %v344 = vrot.slane %v343, 1
        %v345 = vadd.f32 %v343, %v344
        %v346 = vlog2.pop %v338
        %v347 = vmul.f32 %v346, 0.6931472
        %v348 = vlog2.pop %v345
        %v349 = vmul.f32 %v348, 0.6931472
        %v350 = vsub.f32 %v347, %v319
        %v351 = vsub.f32 %v349, %v326
        %v354 = vcombine.low %v350, %v351
        %v356 = vunpack.c.l.s4 1966171168
        %v357 = vunpack.c.0.s8 %v356
        %v358 = vlaneseq
        %v359 = vshrl.u32 %v358, 7
        %v360 = vsub.s32 %v357, %v359
        %v361 = vrot.slane %v354, %v360
        %v363 = vunpack.c.l.s4 1966171168
        %v364 = vunpack.c.0.s8 %v363
        %v365 = vlaneseq
        %v366 = vshrl.u32 %v365, 7
        %v367 = vsub.s32 %v364, %v366
        %v368 = vrot.slane %v361, %v367
        %v370 = vsel %vm271, %v368, 0.0
        %v372 = vlaneseq
        %v373 = vshrl.u32 %v372, 7
        %v374 = vsub.s32 0, %v373
        %v375 = vrot.slane %v370, %v374
        %v376 = vlaneseq
        %v377 = vshrl.u32 %v376, 7
        %v378 = vsub.s32 1, %v377
        %v379 = vrot.slane %v370, %v378
        %vm382 = vcmask 1040384
        %v383 = vsel %vm382, %v375, 0.0
        %v384 = vsel %vm382, %v379, 0.0
        %v385 = vadd.f32 %v383, %v384
        %386 = vadd.xlane.f32.xlu0 %v385
        %v387 = vpop.xlane.xlu0 %386
        %v388 = vrot.slane %v387, 4
        %v389 = vadd.f32 %v387, %v388
        %v390 = vrot.slane %v389, 2
        %v391 = vadd.f32 %v389, %v390
        %v392 = vrot.slane %v391, 1
        %v393 = vadd.f32 %v391, %v392
        %s394 = vtos %v393
        %v395 = vstv %s394
        %vm396 = vcmask 0
        %397 = vst.msk [vmem:[%s263] sm:$0x1] %vm396, %v395
        %v398 = vsel %vm271, 1, 0
        %v399 = vcvt.s32.f32 %v398
        %v401 = vlaneseq
        %v402 = vshrl.u32 %v401, 7
        %v403 = vsub.s32 0, %v402
        %v404 = vrot.slane %v399, %v403
        %v405 = vlaneseq
        %v406 = vshrl.u32 %v405, 7
        %v407 = vsub.s32 1, %v406
        %v408 = vrot.slane %v399, %v407
        %v411 = vsel %vm382, %v404, 0.0
        %v412 = vsel %vm382, %v408, 0.0
        %v413 = vadd.f32 %v411, %v412
        %414 = vadd.xlane.f32.xlu0 %v413
        %v415 = vpop.xlane.xlu0 %414
        %v416 = vrot.slane %v415, 4
        %v417 = vadd.f32 %v415, %v416
        %v418 = vrot.slane %v417, 2
        %v419 = vadd.f32 %v417, %v418
        %v420 = vrot.slane %v419, 1
        %v421 = vadd.f32 %v419, %v420
        %s422 = vtos %v421
        %v423 = vstv %s422
        %424 = vst.msk [vmem:[%s269] sm:$0x1] %vm396, %v423
        %p425 = scmp.lt.s32.totalorder %s25, 1
        %s426 = scalar_select %p425, %s25, 1
        %p427 = scmp.lt.s32.totalorder %s26, 0
        %s428 = scalar_select %p427, %s26, 0
        %s429 = sadd.s32 %s428, %s426
        %s430 = scalar_lea.vmem %s2, %s429
        %p431 = scmp.lt.s32.totalorder %s25, 1
        %s432 = scalar_select %p431, %s25, 1
        %p433 = scmp.lt.s32.totalorder %s26, 0
        %s434 = scalar_select %p433, %s26, 0
        %s435 = sadd.s32 %s434, %s432
        %s436 = scalar_lea.vmem %s3, %s435
        // Predicated region
        $region37: #{tpu_custom_call.1} parent=27 // pred_check
          %p437 = pneg %p109
        $region38: #{tpu_custom_call.1} parent=27 // pred_check_branch
          %439 = sbr.rel (%p437) target = $region40
        $region39: #{tpu_custom_call.1} parent=27 // pred_region
          _
        $region40: #{tpu_custom_call.1} parent=27 // pred_fallthru
          _
        // Predicated region
        $region41: #{tpu_custom_call.1} parent=27 // pred_check
          %p440 = pneg %p137
        $region42: #{tpu_custom_call.1} parent=27 // pred_check_branch
          %442 = sbr.rel (%p440) target = $region44
        $region43: #{tpu_custom_call.1} parent=27 // pred_region
          _
        $region44: #{tpu_custom_call.1} parent=27 // pred_fallthru
          _
      $region28: #{tpu_custom_call.1} parent=5 // pred_fallthru
        _
      %p443 = scmp.le.s32.totalorder 2, %s16
      // Predicated region
      $region45: #{tpu_custom_call.1} parent=5 // pred_check
        %p444 = pneg %p443
      $region46: #{tpu_custom_call.1} parent=5 // pred_check_branch
        %446 = sbr.rel (%p444) target = $region48
      $region47: #{tpu_custom_call.1} parent=5 // pred_region
        %s447 = ssub.s32 %s16, 2
        // Predicated region
        $region49: #{tpu_custom_call.1} parent=47 // pred_check
          %p448 = pneg %p115
        $region50: #{tpu_custom_call.1} parent=47 // pred_check_branch
          %450 = sbr.rel (%p448) target = $region52
        $region51: #{tpu_custom_call.1} parent=47 // pred_region
          %p451 = scmp.lt.s32.totalorder %s27, 1
          %s452 = scalar_select %p451, %s27, 1
          %p453 = scmp.lt.s32.totalorder %s28, 0
          %s454 = scalar_select %p453, %s28, 0
          %s455 = sadd.s32 %s454, %s452
          %s456 = scalar_lea.vmem %s2, %s455
        $region52: #{tpu_custom_call.1} parent=47 // pred_fallthru
          _
        // Predicated region
        $region53: #{tpu_custom_call.1} parent=47 // pred_check
          %p457 = pneg %p143
        $region54: #{tpu_custom_call.1} parent=47 // pred_check_branch
          %459 = sbr.rel (%p457) target = $region56
        $region55: #{tpu_custom_call.1} parent=47 // pred_region
          %p460 = scmp.lt.s32.totalorder %s27, 1
          %s461 = scalar_select %p460, %s27, 1
          %p462 = scmp.lt.s32.totalorder %s28, 0
          %s463 = scalar_select %p462, %s28, 0
          %s464 = sadd.s32 %s463, %s461
          %s465 = scalar_lea.vmem %s3, %s464
        $region56: #{tpu_custom_call.1} parent=47 // pred_fallthru
          _
      $region48: #{tpu_custom_call.1} parent=5 // pred_fallthru
        _
    $region6: #{tpu_custom_call.1} parent=1 // loop_footer
      %s20 = sadd.s32 1, %s16
    $region7: #{tpu_custom_call.1} parent=1 // loop_footer_branch
      %15 = sbr.rel target = $region3
    $region8: #{tpu_custom_call.1} parent=1 // loop_exit
      _
    %466 = vsyncpa [#allocation3], 1
    %s467 = scalar_lea.sflag [#allocation3], 1
    %468 = vsyncpa %s467, 1
    %469 = vsyncpa [#allocation5], 1
    %s470 = scalar_lea.sflag [#allocation5], 1
    %471 = vsyncpa %s470, 1

</llo_original>
